<compile_context>
chip_gen: v6e
topology: v6e:2x2x1
jax: 0.10.0
libtpu: 0.0.40
codegen_flags: <defaults>
</compile_context>

<pallas_src>
import functools

import jax
import jax.numpy as jnp
from jax.experimental import pallas as pl
from jax.experimental.pallas import tpu as pltpu


def _round_up(x, m):
    return ((x + m - 1) // m) * m


def _tensorcores_per_chip():
    """Best-effort detection of TensorCores per chip (v7x has 2, v5e/v6e have 1)."""
    try:
        kind = jax.devices()[0].device_kind.lower()
    except Exception:
        return 1
    return 2 if ("v7" in kind or "7x" in kind) else 1


def _choose_batch_tiling(B, max_tile_rows=1024):
    """Pick (tile_rows, n_blocks): 1 block on 1-TC chips, an even count on 2-TC chips."""
    n_cores = _tensorcores_per_chip()
    n_blocks = n_cores
    while _round_up(pl.cdiv(B, n_blocks), 8) > max_tile_rows:
        n_blocks += n_cores
    tb = _round_up(pl.cdiv(B, n_blocks), 8)
    return tb, n_blocks


def taskout_kernel(x_ref, w1_ref, b1_ref, w2_ref, b2_ref, o_ref):
    # fc1 + relu: bf16 x bf16 -> f32 accumulate on the MXU.
    h = jnp.dot(x_ref[...], w1_ref[...], preferred_element_type=jnp.float32)
    h = jnp.maximum(h + b1_ref[...], 0.0)

    # fc2 (bf16 activations into the MXU, f32 accumulate). Padded class columns
    # have zero weights and a -1e9 bias, so they vanish in the softmax.
    logits = jnp.dot(h.astype(jnp.bfloat16), w2_ref[...],
                     preferred_element_type=jnp.float32) + b2_ref[...]

    # Numerically stable softmax over the lane-dense, padded class dim.
    m = jnp.max(logits, axis=-1, keepdims=True)
    e = jnp.exp(logits - m)
    denom = jnp.sum(e, axis=-1, keepdims=True)
    inv = pl.reciprocal(denom, approx=True)        # EUP vrcp (free slot)
    inv = inv * (2.0 - denom * inv)                # one Newton step -> ~exact recip
    o_ref[...] = (e * inv).astype(o_ref.dtype)


def prepare_taskout_params(w1, b1, w2, b2):
    """One-time weight prep (padding + casts), hoisted out of the per-call path.

    w1: (H, H) stored (in, out); b1: (H,); w2: (H, C) stored (in, out); b2: (C,).
    Returns (w1_bf16, b1_f32[1,H], w2_bf16_padded[H,c_pad], b2_f32_padded[1,c_pad]).
    """
    H, C = w2.shape
    c_pad = max(128, _round_up(C, 128))
    w1b = w1.astype(jnp.bfloat16)
    b1p = b1.reshape(1, H).astype(jnp.float32)
    w2b = jnp.zeros((H, c_pad), jnp.bfloat16).at[:, :C].set(w2.astype(jnp.bfloat16))
    b2p = jnp.full((1, c_pad), -1e9, jnp.float32).at[:, :C].set(
        b2.reshape(1, C).astype(jnp.float32))
    return w1b, b1p, w2b, b2p


@functools.partial(jax.jit, static_argnames=("n_class", "out_dtype"))
def taskout_forward(x, w1b, b1p, w2b, b2p, *, n_class, out_dtype=jnp.float32):
    """x: (B, H) f32/bf16. Prepared params from prepare_taskout_params. Returns (B, n_class)."""
    B, H = x.shape
    assert H % 128 == 0, "hidden dim must be a multiple of 128 for this kernel"
    c_pad = w2b.shape[1]

    # --- batch tiling (generation-aware; see header) --------------------------
    tb, n_blocks = _choose_batch_tiling(B)
    b_pad = tb * n_blocks

    xb = x.astype(jnp.bfloat16)
    if b_pad != B:  # only pad when the tile does not divide B (no unconditional copy)
        xb = jnp.pad(xb, ((0, b_pad - B), (0, 0)))

    # --- VMEM budget: actual footprint (double-buffered worst case) + margin --
    out_itemsize = jnp.dtype(out_dtype).itemsize
    bytes_x_tile = tb * H * 2
    bytes_out_tile = tb * c_pad * out_itemsize
    bytes_weights = H * H * 2 + H * 4 + H * c_pad * 2 + c_pad * 4
    footprint = 2 * (bytes_x_tile + bytes_out_tile + bytes_weights)
    vmem_limit = min(max(int(1.25 * footprint) + (2 << 20), 8 << 20), 32 << 20)

    out = pl.pallas_call(
        taskout_kernel,
        out_shape=jax.ShapeDtypeStruct((b_pad, c_pad), out_dtype),
        grid=(n_blocks,),
        in_specs=[
            pl.BlockSpec((tb, H), lambda i: (i, 0)),      # x: streamed per batch tile
            pl.BlockSpec((H, H), lambda i: (0, 0)),       # w1: VMEM-resident
            pl.BlockSpec((1, H), lambda i: (0, 0)),       # b1
            pl.BlockSpec((H, c_pad), lambda i: (0, 0)),   # w2 (padded)
            pl.BlockSpec((1, c_pad), lambda i: (0, 0)),   # b2 (padded, -1e9 in pad cols)
        ],
        out_specs=pl.BlockSpec((tb, c_pad), lambda i: (i, 0)),
        compiler_params=pltpu.CompilerParams(
            dimension_semantics=("parallel",),
            vmem_limit_bytes=vmem_limit,
        ),
    )(xb, w1b, b1p, w2b, b2p)

    return out[:B, :n_class]


def reference_forward(x, w1, b1, w2, b2):
    # Mirrors the kernel's numerics (bf16 MXU inputs, f32 accumulate) so the
    # comparison tolerance only has to absorb rounding differences.
    xb = x.astype(jnp.bfloat16)
    h = jnp.dot(xb, w1.astype(jnp.bfloat16),
                preferred_element_type=jnp.float32) + b1.reshape(1, -1)
    h = jnp.maximum(h, 0.0)
    logits = jnp.dot(h.astype(jnp.bfloat16), w2.astype(jnp.bfloat16),
                     preferred_element_type=jnp.float32) + b2.reshape(1, -1)
    return jax.nn.softmax(logits, axis=1)


if __name__ == "__main__":
    # Small shapes consistent with the module (hidden_layer -> 256, n_class -> 10).
    B, H, C = 256, 256, 10

    key = jax.random.PRNGKey(0)
    kx, kw1, kb1, kw2, kb2 = jax.random.split(key, 5)

    x = jax.random.normal(kx, (B, H), dtype=jnp.float32)

    # PyTorch-like init (uniform +-1/sqrt(fan_in)); weights stored (in, out).
    s = 1.0 / jnp.sqrt(jnp.float32(H))
    w1 = jax.random.uniform(kw1, (H, H), jnp.float32, -s, s)
    b1 = jax.random.uniform(kb1, (H,), jnp.float32, -s, s)
    w2 = jax.random.uniform(kw2, (H, C), jnp.float32, -s, s)
    b2 = jax.random.uniform(kb2, (C,), jnp.float32, -s, s)

    # One-time weight prep (hoisted out of the per-call path, per perf review).
    w1b, b1p, w2b, b2p = prepare_taskout_params(w1, b1, w2, b2)

    out = taskout_forward(x, w1b, b1p, w2b, b2p, n_class=C)
    out = jax.block_until_ready(out)

    ref = reference_forward(x, w1, b1, w2, b2)

    assert out.shape == (B, C)
    # Tolerances absorb bf16 MXU rounding / accumulation-order differences.
    assert jnp.allclose(out, ref, atol=3e-3, rtol=2e-2), "mismatch vs reference"
    assert jnp.allclose(jnp.sum(out, axis=1), 1.0, atol=3e-3), "softmax rows must sum to ~1"

    print("KERNEL_OK")
</pallas_src>

<mosaic_0001>
module attributes {stable_mosaic.version = 11 : i64} {
  func.func @taskout_kernel(%arg0: i32, %arg1: memref<256x256xbf16, #tpu.memory_space<vmem>>, %arg2: memref<256x256xbf16, #tpu.memory_space<vmem>>, %arg3: memref<1x256xf32, #tpu.memory_space<vmem>>, %arg4: memref<256x128xbf16, #tpu.memory_space<vmem>>, %arg5: memref<1x128xf32, #tpu.memory_space<vmem>>, %arg6: memref<256x128xf32, #tpu.memory_space<vmem>>) attributes {dimension_semantics = [#tpu.dimension_semantics<parallel>], iteration_bounds = array<i64: 1>, scalar_prefetch = 0 : i64, scratch_operands = 0 : i64, tpu.core_type = #tpu.core_type<tc>, window_params = [{transform_indices = @transform_0, window_bounds = array<i64: 256, 256>}, {pipeline_mode = #tpu.pipeline_mode<synchronous>, transform_indices = @transform_1, window_bounds = array<i64: 256, 256>}, {pipeline_mode = #tpu.pipeline_mode<synchronous>, transform_indices = @transform_2, window_bounds = array<i64: 1, 256>}, {pipeline_mode = #tpu.pipeline_mode<synchronous>, transform_indices = @transform_3, window_bounds = array<i64: 256, 128>}, {pipeline_mode = #tpu.pipeline_mode<synchronous>, transform_indices = @transform_4, window_bounds = array<i64: 1, 128>}, {transform_indices = @transform_5, window_bounds = array<i64: 256, 128>}]} {
    %c0 = arith.constant 0 : index
    %c0_0 = arith.constant 0 : index
    %0 = vector.load %arg1[%c0, %c0_0] : memref<256x256xbf16, #tpu.memory_space<vmem>>, vector<256x256xbf16>
    %c0_1 = arith.constant 0 : index
    %c0_2 = arith.constant 0 : index
    %1 = vector.load %arg2[%c0_1, %c0_2] : memref<256x256xbf16, #tpu.memory_space<vmem>>, vector<256x256xbf16>
    %cst = arith.constant dense<0.000000e+00> : vector<256x256xf32>
    %2 = tpu.matmul %0, %1, %cst {dimension_numbers = #tpu.dot_dimension_numbers<[1], [0], [0], [1], [0, 0, 1, 1], [], []>} : vector<256x256xbf16>, vector<256x256xbf16>, vector<256x256xf32> -> vector<256x256xf32>
    %c0_3 = arith.constant 0 : index
    %c0_4 = arith.constant 0 : index
    %3 = vector.load %arg3[%c0_3, %c0_4] : memref<1x256xf32, #tpu.memory_space<vmem>>, vector<1x256xf32>
    %4 = vector.broadcast %3 : vector<1x256xf32> to vector<256x256xf32>
    %5 = arith.addf %2, %4 : vector<256x256xf32>
    %cst_5 = arith.constant 0.000000e+00 : f32
    %6 = vector.broadcast %cst_5 : f32 to vector<256x256xf32>
    %7 = arith.maximumf %5, %6 : vector<256x256xf32>
    %8 = arith.truncf %7 : vector<256x256xf32> to vector<256x256xbf16>
    %c0_6 = arith.constant 0 : index
    %c0_7 = arith.constant 0 : index
    %9 = vector.load %arg4[%c0_6, %c0_7] : memref<256x128xbf16, #tpu.memory_space<vmem>>, vector<256x128xbf16>
    %cst_8 = arith.constant dense<0.000000e+00> : vector<256x128xf32>
    %10 = tpu.matmul %8, %9, %cst_8 {dimension_numbers = #tpu.dot_dimension_numbers<[1], [0], [0], [1], [0, 0, 1, 1], [], []>} : vector<256x256xbf16>, vector<256x128xbf16>, vector<256x128xf32> -> vector<256x128xf32>
    %c0_9 = arith.constant 0 : index
    %c0_10 = arith.constant 0 : index
    %11 = vector.load %arg5[%c0_9, %c0_10] : memref<1x128xf32, #tpu.memory_space<vmem>>, vector<1x128xf32>
    %12 = vector.broadcast %11 : vector<1x128xf32> to vector<256x128xf32>
    %13 = arith.addf %10, %12 : vector<256x128xf32>
    %cst_11 = arith.constant dense<0xFF800000> : vector<256xf32>
    %14 = vector.multi_reduction <maximumf>, %13, %cst_11 [1] : vector<256x128xf32> to vector<256xf32>
    %15 = vector.shape_cast %14 : vector<256xf32> to vector<256x1xf32>
    %16 = vector.broadcast %15 : vector<256x1xf32> to vector<256x128xf32>
    %17 = arith.subf %13, %16 : vector<256x128xf32>
    %18 = math.exp %17 : vector<256x128xf32>
    %cst_12 = arith.constant dense<0.000000e+00> : vector<256xf32>
    %19 = vector.multi_reduction <add>, %18, %cst_12 [1] : vector<256x128xf32> to vector<256xf32>
    %20 = vector.shape_cast %19 : vector<256xf32> to vector<256x1xf32>
    %21 = tpu.reciprocal %20 {approx = true} : vector<256x1xf32> -> vector<256x1xf32>
    %22 = arith.mulf %20, %21 : vector<256x1xf32>
    %cst_13 = arith.constant 2.000000e+00 : f32
    %23 = vector.broadcast %cst_13 : f32 to vector<256x1xf32>
    %24 = arith.subf %23, %22 : vector<256x1xf32>
    %25 = arith.mulf %21, %24 : vector<256x1xf32>
    %26 = vector.broadcast %25 : vector<256x1xf32> to vector<256x128xf32>
    %27 = arith.mulf %18, %26 : vector<256x128xf32>
    %c0_14 = arith.constant 0 : index
    %c0_15 = arith.constant 0 : index
    %28 = vector.load %arg6[%c0_14, %c0_15] : memref<256x128xf32, #tpu.memory_space<vmem>>, vector<256x128xf32>
    tpu.vector_store %arg6[%c0_14, %c0_15], %27 {strides = array<i32>} : memref<256x128xf32, #tpu.memory_space<vmem>>, vector<256x128xf32>,
    return
  }
  func.func @transform_0(%arg0: i32) -> (i32, i32) {
    %c0_i32 = arith.constant 0 : i32
    %c0_i32_0 = arith.constant 0 : i32
    return %arg0, %c0_i32 : i32, i32
  }
  func.func @transform_1(%arg0: i32) -> (i32, i32) {
    %c0_i32 = arith.constant 0 : i32
    %c0_i32_0 = arith.constant 0 : i32
    %c0_i32_1 = arith.constant 0 : i32
    return %c0_i32, %c0_i32_0 : i32, i32
  }
  func.func @transform_2(%arg0: i32) -> (i32, i32) {
    %c0_i32 = arith.constant 0 : i32
    %c0_i32_0 = arith.constant 0 : i32
    %c0_i32_1 = arith.constant 0 : i32
    return %c0_i32, %c0_i32_0 : i32, i32
  }
  func.func @transform_3(%arg0: i32) -> (i32, i32) {
    %c0_i32 = arith.constant 0 : i32
    %c0_i32_0 = arith.constant 0 : i32
    %c0_i32_1 = arith.constant 0 : i32
    return %c0_i32, %c0_i32_0 : i32, i32
  }
  func.func @transform_4(%arg0: i32) -> (i32, i32) {
    %c0_i32 = arith.constant 0 : i32
    %c0_i32_0 = arith.constant 0 : i32
    %c0_i32_1 = arith.constant 0 : i32
    return %c0_i32, %c0_i32_0 : i32, i32
  }
  func.func @transform_5(%arg0: i32) -> (i32, i32) {
    %c0_i32 = arith.constant 0 : i32
    %c0_i32_0 = arith.constant 0 : i32
    return %arg0, %c0_i32 : i32, i32
  }
}

</mosaic_0001>

<llo_original>
// kernel: taskout_forward.1
$region0: #{taskout_forward.1}
  #allocation0 [shape = 'u32[]', space=smem, size = 0x4, offset = 0x4, fixed_abs, tag = 'smem constant byte address 0x4 - core index']
  #allocation1 [shape = 'u32[144,128]{1,0:T(1,128)}', space=vmem, size = 0x12000, scoped, tag = 'internal scratch']
  %s0 = inlined_call_operand.vmem [shape: bf16[256,256], index: 0, kind: input, shape index: {}]
  %s1 = inlined_call_operand.vmem [shape: bf16[256,256], index: 1, kind: input, shape index: {}]
  %s2 = inlined_call_operand.vmem [shape: f32[1,256], index: 2, kind: input, shape index: {}]
  %s3 = inlined_call_operand.vmem [shape: bf16[256,128], index: 3, kind: input, shape index: {}]
  %s4 = inlined_call_operand.vmem [shape: f32[1,128], index: 4, kind: input, shape index: {}]
  %s5 = inlined_call_operand.vmem [shape: f32[256,128], index: 5, kind: output, shape index: {}]
  %s6 = sld [smem:[#allocation0]]
  $region30: #{taskout_forward.1} parent=0
    _
  %s8 = ssub.s32 1, %s6
  %s9 = scalar_select 0, %s8, %s6
  // Predicated region
  $region2: #{taskout_forward.1} parent=0 // pred_check
    _
  $region3: #{taskout_forward.1} parent=0 // pred_check_branch
    %11 = sbr.rel (0) target = $region5
  $region4: #{taskout_forward.1} parent=0 // pred_region
    _
  $region5: #{taskout_forward.1} parent=0 // pred_fallthru
    _
  // Predicated region
  $region6: #{taskout_forward.1} parent=0 // pred_check
    _
  $region7: #{taskout_forward.1} parent=0 // pred_check_branch
    %13 = sbr.rel (0) target = $region9
  $region8: #{taskout_forward.1} parent=0 // pred_region
    _
  $region9: #{taskout_forward.1} parent=0 // pred_fallthru
    _
  // Predicated region
  $region10: #{taskout_forward.1} parent=0 // pred_check
    _
  $region11: #{taskout_forward.1} parent=0 // pred_check_branch
    %15 = sbr.rel (0) target = $region13
  $region12: #{taskout_forward.1} parent=0 // pred_region
    _
  $region13: #{taskout_forward.1} parent=0 // pred_fallthru
    _
  // Predicated region
  $region14: #{taskout_forward.1} parent=0 // pred_check
    _
  $region15: #{taskout_forward.1} parent=0 // pred_check_branch
    %17 = sbr.rel (0) target = $region17
  $region16: #{taskout_forward.1} parent=0 // pred_region
    _
  $region17: #{taskout_forward.1} parent=0 // pred_fallthru
    _
  // Predicated region
  $region18: #{taskout_forward.1} parent=0 // pred_check
    _
  $region19: #{taskout_forward.1} parent=0 // pred_check_branch
    %19 = sbr.rel (0) target = $region21
  $region20: #{taskout_forward.1} parent=0 // pred_region
    _
  $region21: #{taskout_forward.1} parent=0 // pred_fallthru
    _
  %v21 = vld [vmem:[%s0] sm:$0xff]
  %v22 = vld [vmem:[%s0 + $0x8] sm:$0xff]
  %v23 = vld [vmem:[%s0 + $0x10] sm:$0xff]
  %v24 = vld [vmem:[%s0 + $0x18] sm:$0xff]
  %v25 = vld [vmem:[%s0 + $0x20] sm:$0xff]
  %v26 = vld [vmem:[%s0 + $0x28] sm:$0xff]
  %v27 = vld [vmem:[%s0 + $0x30] sm:$0xff]
  %v28 = vld [vmem:[%s0 + $0x38] sm:$0xff]
  %v29 = vld [vmem:[%s0 + $0x40] sm:$0xff]
  %v30 = vld [vmem:[%s0 + $0x48] sm:$0xff]
  %v31 = vld [vmem:[%s0 + $0x50] sm:$0xff]
  %v32 = vld [vmem:[%s0 + $0x58] sm:$0xff]
  %v33 = vld [vmem:[%s0 + $0x60] sm:$0xff]
  %v34 = vld [vmem:[%s0 + $0x68] sm:$0xff]
  %v35 = vld [vmem:[%s0 + $0x70] sm:$0xff]
  %v36 = vld [vmem:[%s0 + $0x78] sm:$0xff]
  %v37 = vld [vmem:[%s0 + $0x80] sm:$0xff]
  %v38 = vld [vmem:[%s0 + $0x88] sm:$0xff]
  %v39 = vld [vmem:[%s0 + $0x90] sm:$0xff]
  %v40 = vld [vmem:[%s0 + $0x98] sm:$0xff]
  %v41 = vld [vmem:[%s0 + $0xa0] sm:$0xff]
  %v42 = vld [vmem:[%s0 + $0xa8] sm:$0xff]
  %v43 = vld [vmem:[%s0 + $0xb0] sm:$0xff]
  %v44 = vld [vmem:[%s0 + $0xb8] sm:$0xff]
  %v45 = vld [vmem:[%s0 + $0xc0] sm:$0xff]
  %v46 = vld [vmem:[%s0 + $0xc8] sm:$0xff]
  %v47 = vld [vmem:[%s0 + $0xd0] sm:$0xff]
  %v48 = vld [vmem:[%s0 + $0xd8] sm:$0xff]
  %v49 = vld [vmem:[%s0 + $0xe0] sm:$0xff]
  %v50 = vld [vmem:[%s0 + $0xe8] sm:$0xff]
  %v51 = vld [vmem:[%s0 + $0xf0] sm:$0xff]
  %v52 = vld [vmem:[%s0 + $0xf8] sm:$0xff]
  %v53 = vld [vmem:[%s1] sm:$0xff]
  %v54 = vld [vmem:[%s1 + $0x8] sm:$0xff]
  %v55 = vld [vmem:[%s1 + $0x10] sm:$0xff]
  %v56 = vld [vmem:[%s1 + $0x18] sm:$0xff]
  %v57 = vld [vmem:[%s1 + $0x20] sm:$0xff]
  %v58 = vld [vmem:[%s1 + $0x28] sm:$0xff]
  %v59 = vld [vmem:[%s1 + $0x30] sm:$0xff]
  %v60 = vld [vmem:[%s1 + $0x38] sm:$0xff]
  %v61 = vld [vmem:[%s1 + $0x40] sm:$0xff]
  %v62 = vld [vmem:[%s1 + $0x48] sm:$0xff]
  %v63 = vld [vmem:[%s1 + $0x50] sm:$0xff]
  %v64 = vld [vmem:[%s1 + $0x58] sm:$0xff]
  %v65 = vld [vmem:[%s1 + $0x60] sm:$0xff]
  %v66 = vld [vmem:[%s1 + $0x68] sm:$0xff]
  %v67 = vld [vmem:[%s1 + $0x70] sm:$0xff]
  %v68 = vld [vmem:[%s1 + $0x78] sm:$0xff]
  %v69 = vld [vmem:[%s1 + $0x80] sm:$0xff]
  %v70 = vld [vmem:[%s1 + $0x88] sm:$0xff]
  %v71 = vld [vmem:[%s1 + $0x90] sm:$0xff]
  %v72 = vld [vmem:[%s1 + $0x98] sm:$0xff]
  %v73 = vld [vmem:[%s1 + $0xa0] sm:$0xff]
  %v74 = vld [vmem:[%s1 + $0xa8] sm:$0xff]
  %v75 = vld [vmem:[%s1 + $0xb0] sm:$0xff]
  %v76 = vld [vmem:[%s1 + $0xb8] sm:$0xff]
  %v77 = vld [vmem:[%s1 + $0xc0] sm:$0xff]
  %v78 = vld [vmem:[%s1 + $0xc8] sm:$0xff]
  %v79 = vld [vmem:[%s1 + $0xd0] sm:$0xff]
  %v80 = vld [vmem:[%s1 + $0xd8] sm:$0xff]
  %v81 = vld [vmem:[%s1 + $0xe0] sm:$0xff]
  %v82 = vld [vmem:[%s1 + $0xe8] sm:$0xff]
  %v83 = vld [vmem:[%s1 + $0xf0] sm:$0xff]
  %v84 = vld [vmem:[%s1 + $0xf8] sm:$0xff]
  %v85 = vld [vmem:[%s2] sm:$0x3]
  %v87 = vlaneseq
  %v88 = vshrl.u32 %v87, 7
  %v89 = vsub.s32 0, %v88
  %v90 = vrot.slane %v85, %v89
  %v91 = vlaneseq
  %v92 = vshrl.u32 %v91, 7
  %v93 = vsub.s32 1, %v92
  %v94 = vrot.slane %v85, %v93
  %v129 = vunpack.c.l.b16 %v21
  %v130 = vunpack.c.h.b16 %v21
  %v131 = vunpack.c.l.b16 %v22
  %v132 = vunpack.c.h.b16 %v22
  %v133 = vunpack.c.l.b16 %v23
  %v134 = vunpack.c.h.b16 %v23
  %v135 = vunpack.c.l.b16 %v24
  %v136 = vunpack.c.h.b16 %v24
  %v137 = vunpack.c.l.b16 %v25
  %v138 = vunpack.c.h.b16 %v25
  %v139 = vunpack.c.l.b16 %v26
  %v140 = vunpack.c.h.b16 %v26
  %v141 = vunpack.c.l.b16 %v27
  %v142 = vunpack.c.h.b16 %v27
  %v143 = vunpack.c.l.b16 %v28
  %v144 = vunpack.c.h.b16 %v28
  %v145 = vunpack.c.l.b16 %v29
  %v146 = vunpack.c.h.b16 %v29
  %v147 = vunpack.c.l.b16 %v30
  %v148 = vunpack.c.h.b16 %v30
  %v149 = vunpack.c.l.b16 %v31
  %v150 = vunpack.c.h.b16 %v31
  %v151 = vunpack.c.l.b16 %v32
  %v152 = vunpack.c.h.b16 %v32
  %v153 = vunpack.c.l.b16 %v33
  %v154 = vunpack.c.h.b16 %v33
  %v155 = vunpack.c.l.b16 %v34
  %v156 = vunpack.c.h.b16 %v34
  %v157 = vunpack.c.l.b16 %v35
  %v158 = vunpack.c.h.b16 %v35
  %v159 = vunpack.c.l.b16 %v36
  %v160 = vunpack.c.h.b16 %v36
  %v161 = vunpack.c.l.b16 %v37
  %v162 = vunpack.c.h.b16 %v37
  %v163 = vunpack.c.l.b16 %v38
  %v164 = vunpack.c.h.b16 %v38
  %v165 = vunpack.c.l.b16 %v39
  %v166 = vunpack.c.h.b16 %v39
  %v167 = vunpack.c.l.b16 %v40
  %v168 = vunpack.c.h.b16 %v40
  %v169 = vunpack.c.l.b16 %v41
  %v170 = vunpack.c.h.b16 %v41
  %v171 = vunpack.c.l.b16 %v42
  %v172 = vunpack.c.h.b16 %v42
  %v173 = vunpack.c.l.b16 %v43
  %v174 = vunpack.c.h.b16 %v43
  %v175 = vunpack.c.l.b16 %v44
  %v176 = vunpack.c.h.b16 %v44
  %v177 = vunpack.c.l.b16 %v45
  %v178 = vunpack.c.h.b16 %v45
  %v179 = vunpack.c.l.b16 %v46
  %v180 = vunpack.c.h.b16 %v46
  %v181 = vunpack.c.l.b16 %v47
  %v182 = vunpack.c.h.b16 %v47
  %v183 = vunpack.c.l.b16 %v48
  %v184 = vunpack.c.h.b16 %v48
  %v185 = vunpack.c.l.b16 %v49
  %v186 = vunpack.c.h.b16 %v49
  %v187 = vunpack.c.l.b16 %v50
  %v188 = vunpack.c.h.b16 %v50
  %v189 = vunpack.c.l.b16 %v51
  %v190 = vunpack.c.h.b16 %v51
  %v191 = vunpack.c.l.b16 %v52
  %v192 = vunpack.c.h.b16 %v52
  %v193 = vpack.c.b16 %v131, %v129
  %v194 = vpack.c.b16 %v132, %v130
  %v195 = vpack.c.b16 %v135, %v133
  %v196 = vpack.c.b16 %v136, %v134
  %v197 = vpack.c.b16 %v139, %v137
  %v198 = vpack.c.b16 %v140, %v138
  %v199 = vpack.c.b16 %v143, %v141
  %v200 = vpack.c.b16 %v144, %v142
  %v201 = vpack.c.b16 %v147, %v145
  %v202 = vpack.c.b16 %v148, %v146
  %v203 = vpack.c.b16 %v151, %v149
  %v204 = vpack.c.b16 %v152, %v150
  %v205 = vpack.c.b16 %v155, %v153
  %v206 = vpack.c.b16 %v156, %v154
  %v207 = vpack.c.b16 %v159, %v157
  %v208 = vpack.c.b16 %v160, %v158
  %v209 = vpack.c.b16 %v163, %v161
  %v210 = vpack.c.b16 %v164, %v162
  %v211 = vpack.c.b16 %v167, %v165
  %v212 = vpack.c.b16 %v168, %v166
  %v213 = vpack.c.b16 %v171, %v169
  %v214 = vpack.c.b16 %v172, %v170
  %v215 = vpack.c.b16 %v175, %v173
  %v216 = vpack.c.b16 %v176, %v174
  %v217 = vpack.c.b16 %v179, %v177
  %v218 = vpack.c.b16 %v180, %v178
  %v219 = vpack.c.b16 %v183, %v181
  %v220 = vpack.c.b16 %v184, %v182
  %v221 = vpack.c.b16 %v187, %v185
  %v222 = vpack.c.b16 %v188, %v186
  %v223 = vpack.c.b16 %v191, %v189
  %v224 = vpack.c.b16 %v192, %v190
  %v289 = vunpack.c.l.b16 %v53
  %v290 = vunpack.c.h.b16 %v53
  %v291 = vunpack.c.l.b16 %v54
  %v292 = vunpack.c.h.b16 %v54
  %v293 = vunpack.c.l.b16 %v55
  %v294 = vunpack.c.h.b16 %v55
  %v295 = vunpack.c.l.b16 %v56
  %v296 = vunpack.c.h.b16 %v56
  %v297 = vunpack.c.l.b16 %v57
  %v298 = vunpack.c.h.b16 %v57
  %v299 = vunpack.c.l.b16 %v58
  %v300 = vunpack.c.h.b16 %v58
  %v301 = vunpack.c.l.b16 %v59
  %v302 = vunpack.c.h.b16 %v59
  %v303 = vunpack.c.l.b16 %v60
  %v304 = vunpack.c.h.b16 %v60
  %v305 = vunpack.c.l.b16 %v61
  %v306 = vunpack.c.h.b16 %v61
  %v307 = vunpack.c.l.b16 %v62
  %v308 = vunpack.c.h.b16 %v62
  %v309 = vunpack.c.l.b16 %v63
  %v310 = vunpack.c.h.b16 %v63
  %v311 = vunpack.c.l.b16 %v64
  %v312 = vunpack.c.h.b16 %v64
  %v313 = vunpack.c.l.b16 %v65
  %v314 = vunpack.c.h.b16 %v65
  %v315 = vunpack.c.l.b16 %v66
  %v316 = vunpack.c.h.b16 %v66
  %v317 = vunpack.c.l.b16 %v67
  %v318 = vunpack.c.h.b16 %v67
  %v319 = vunpack.c.l.b16 %v68
  %v320 = vunpack.c.h.b16 %v68
  %v321 = vunpack.c.l.b16 %v69
  %v322 = vunpack.c.h.b16 %v69
  %v323 = vunpack.c.l.b16 %v70
  %v324 = vunpack.c.h.b16 %v70
  %v325 = vunpack.c.l.b16 %v71
  %v326 = vunpack.c.h.b16 %v71
  %v327 = vunpack.c.l.b16 %v72
  %v328 = vunpack.c.h.b16 %v72
  %v329 = vunpack.c.l.b16 %v73
  %v330 = vunpack.c.h.b16 %v73
  %v331 = vunpack.c.l.b16 %v74
  %v332 = vunpack.c.h.b16 %v74
  %v333 = vunpack.c.l.b16 %v75
  %v334 = vunpack.c.h.b16 %v75
  %v335 = vunpack.c.l.b16 %v76
  %v336 = vunpack.c.h.b16 %v76
  %v337 = vunpack.c.l.b16 %v77
  %v338 = vunpack.c.h.b16 %v77
  %v339 = vunpack.c.l.b16 %v78
  %v340 = vunpack.c.h.b16 %v78
  %v341 = vunpack.c.l.b16 %v79
  %v342 = vunpack.c.h.b16 %v79
  %v343 = vunpack.c.l.b16 %v80
  %v344 = vunpack.c.h.b16 %v80
  %v345 = vunpack.c.l.b16 %v81
  %v346 = vunpack.c.h.b16 %v81
  %v347 = vunpack.c.l.b16 %v82
  %v348 = vunpack.c.h.b16 %v82
  %v349 = vunpack.c.l.b16 %v83
  %v350 = vunpack.c.h.b16 %v83
  %v351 = vunpack.c.l.b16 %v84
  %v352 = vunpack.c.h.b16 %v84
  %v353 = vpack.c.b16 %v291, %v289
  %v354 = vpack.c.b16 %v292, %v290
  %v355 = vpack.c.b16 %v295, %v293
  %v356 = vpack.c.b16 %v296, %v294
  %v357 = vpack.c.b16 %v299, %v297
  %v358 = vpack.c.b16 %v300, %v298
  %v359 = vpack.c.b16 %v303, %v301
  %v360 = vpack.c.b16 %v304, %v302
  %v361 = vpack.c.b16 %v307, %v305
  %v362 = vpack.c.b16 %v308, %v306
  %v363 = vpack.c.b16 %v311, %v309
  %v364 = vpack.c.b16 %v312, %v310
  %v365 = vpack.c.b16 %v315, %v313
  %v366 = vpack.c.b16 %v316, %v314
  %v367 = vpack.c.b16 %v319, %v317
  %v368 = vpack.c.b16 %v320, %v318
  %v369 = vpack.c.b16 %v323, %v321
  %v370 = vpack.c.b16 %v324, %v322
  %v371 = vpack.c.b16 %v327, %v325
  %v372 = vpack.c.b16 %v328, %v326
  %v373 = vpack.c.b16 %v331, %v329
  %v374 = vpack.c.b16 %v332, %v330
  %v375 = vpack.c.b16 %v335, %v333
  %v376 = vpack.c.b16 %v336, %v334
  %v377 = vpack.c.b16 %v339, %v337
  %v378 = vpack.c.b16 %v340, %v338
  %v379 = vpack.c.b16 %v343, %v341
  %v380 = vpack.c.b16 %v344, %v342
  %v381 = vpack.c.b16 %v347, %v345
  %v382 = vpack.c.b16 %v348, %v346
  %v383 = vpack.c.b16 %v351, %v349
  %v384 = vpack.c.b16 %v352, %v350
  %417 = vmatprep.subr.bf16.mxu0 %v368
  %418 = vmatpush1.bf16.msra.mxu0 %v367
  %419 = vmatprep.subr.bf16.mxu0 %v366
  %420 = vmatpush1.bf16.msra.mxu0 %v365
  %421 = vmatprep.subr.bf16.mxu0 %v364
  %422 = vmatpush1.bf16.msra.mxu0 %v363
  %423 = vmatprep.subr.bf16.mxu0 %v362
  %424 = vmatpush1.bf16.msra.mxu0 %v361
  %425 = vmatprep.subr.bf16.mxu0 %v360
  %426 = vmatpush1.bf16.msra.mxu0 %v359
  %427 = vmatprep.subr.bf16.mxu0 %v358
  %428 = vmatpush1.bf16.msra.mxu0 %v357
  %429 = vmatprep.subr.bf16.mxu0 %v356
  %430 = vmatpush1.bf16.msra.mxu0 %v355
  %431 = vmatprep.subr.bf16.mxu0 %v354
  %432 = vmatpush1.bf16.msra.mxu0 %v353
  %433 = vmatprep.subr.bf16.mxu0 %v384
  %434 = vmatpush2.bf16.msra.mxu0 %v383
  %435 = vmatprep.subr.bf16.mxu0 %v382
  %436 = vmatpush2.bf16.msra.mxu0 %v381
  %437 = vmatprep.subr.bf16.mxu0 %v380
  %438 = vmatpush2.bf16.msra.mxu0 %v379
  %439 = vmatprep.subr.bf16.mxu0 %v378
  %440 = vmatpush2.bf16.msra.mxu0 %v377
  %441 = vmatprep.subr.bf16.mxu0 %v376
  %442 = vmatpush2.bf16.msra.mxu0 %v375
  %443 = vmatprep.subr.bf16.mxu0 %v374
  %444 = vmatpush2.bf16.msra.mxu0 %v373
  %445 = vmatprep.subr.bf16.mxu0 %v372
  %446 = vmatpush2.bf16.msra.mxu0 %v371
  %447 = vmatprep.subr.bf16.mxu0 %v370
  %448 = vmatpush2.bf16.msra.mxu0 %v369
  %449 = vmatprep.mubr.bf16.mxu0 %v194
  %450 = vmatmul.mubr.bf16.gmra.mxu0 %v193
  %v451 = vpop.f32.mrf.mxu0
  %v452 = vadd.f32 %v90, %v451
  %v453 = vpop.f32.mrf.mxu0
  %v454 = vadd.f32 %v94, %v453
  %v455 = vpop.f32.mrf.mxu0
  %v456 = vadd.f32 %v90, %v455
  %v457 = vpop.f32.mrf.mxu0
  %v458 = vadd.f32 %v94, %v457
  %459 = vmatprep.mubr.bf16.mxu0 %v196
  %460 = vmatmul.mubr.bf16.gmra.mxu0 %v195
  %v461 = vpop.f32.mrf.mxu0
  %v462 = vadd.f32 %v90, %v461
  %v463 = vpop.f32.mrf.mxu0
  %v464 = vadd.f32 %v94, %v463
  %v465 = vpop.f32.mrf.mxu0
  %v466 = vadd.f32 %v90, %v465
  %v467 = vpop.f32.mrf.mxu0
  %v468 = vadd.f32 %v94, %v467
  %469 = vmatprep.mubr.bf16.mxu0 %v198
  %470 = vmatmul.mubr.bf16.gmra.mxu0 %v197
  %v471 = vpop.f32.mrf.mxu0
  %v472 = vadd.f32 %v90, %v471
  %v473 = vpop.f32.mrf.mxu0
  %v474 = vadd.f32 %v94, %v473
  %v475 = vpop.f32.mrf.mxu0
  %v476 = vadd.f32 %v90, %v475
  %v477 = vpop.f32.mrf.mxu0
  %v478 = vadd.f32 %v94, %v477
  %479 = vmatprep.mubr.bf16.mxu0 %v200
  %480 = vmatmul.mubr.bf16.gmra.mxu0 %v199
  %v481 = vpop.f32.mrf.mxu0
  %v482 = vadd.f32 %v90, %v481
  %v483 = vpop.f32.mrf.mxu0
  %v484 = vadd.f32 %v94, %v483
  %v485 = vpop.f32.mrf.mxu0
  %v486 = vadd.f32 %v90, %v485
  %v487 = vpop.f32.mrf.mxu0
  %v488 = vadd.f32 %v94, %v487
  %489 = vmatprep.mubr.bf16.mxu0 %v202
  %490 = vmatmul.mubr.bf16.gmra.mxu0 %v201
  %v491 = vpop.f32.mrf.mxu0
  %v492 = vadd.f32 %v90, %v491
  %v493 = vpop.f32.mrf.mxu0
  %v494 = vadd.f32 %v94, %v493
  %v495 = vpop.f32.mrf.mxu0
  %v496 = vadd.f32 %v90, %v495
  %v497 = vpop.f32.mrf.mxu0
  %v498 = vadd.f32 %v94, %v497
  %499 = vmatprep.mubr.bf16.mxu0 %v204
  %500 = vmatmul.mubr.bf16.gmra.mxu0 %v203
  %v501 = vpop.f32.mrf.mxu0
  %v502 = vadd.f32 %v90, %v501
  %v503 = vpop.f32.mrf.mxu0
  %v504 = vadd.f32 %v94, %v503
  %v505 = vpop.f32.mrf.mxu0
  %v506 = vadd.f32 %v90, %v505
  %v507 = vpop.f32.mrf.mxu0
  %v508 = vadd.f32 %v94, %v507
  %509 = vmatprep.mubr.bf16.mxu0 %v206
  %510 = vmatmul.mubr.bf16.gmra.mxu0 %v205
  %v511 = vpop.f32.mrf.mxu0
  %v512 = vadd.f32 %v90, %v511
  %v513 = vpop.f32.mrf.mxu0
  %v514 = vadd.f32 %v94, %v513
  %v515 = vpop.f32.mrf.mxu0
  %v516 = vadd.f32 %v90, %v515
  %v517 = vpop.f32.mrf.mxu0
  %v518 = vadd.f32 %v94, %v517
  %519 = vmatprep.mubr.bf16.mxu0 %v208
  %520 = vmatmul.mubr.bf16.gmra.mxu0 %v207
  %v521 = vpop.f32.mrf.mxu0
  %v522 = vadd.f32 %v90, %v521
  %v523 = vpop.f32.mrf.mxu0
  %v524 = vadd.f32 %v94, %v523
  %v525 = vpop.f32.mrf.mxu0
  %v526 = vadd.f32 %v90, %v525
  %v527 = vpop.f32.mrf.mxu0
  %v528 = vadd.f32 %v94, %v527
  %529 = vmatprep.mubr.bf16.mxu0 %v210
  %530 = vmatmul.mubr.bf16.gmra.mxu0 %v209
  %v531 = vpop.f32.mrf.mxu0
  %v532 = vadd.f32 %v90, %v531
  %v533 = vpop.f32.mrf.mxu0
  %v534 = vadd.f32 %v94, %v533
  %v535 = vpop.f32.mrf.mxu0
  %v536 = vadd.f32 %v90, %v535
  %v537 = vpop.f32.mrf.mxu0
  %v538 = vadd.f32 %v94, %v537
  %539 = vmatprep.mubr.bf16.mxu0 %v212
  %540 = vmatmul.mubr.bf16.gmra.mxu0 %v211
  %v541 = vpop.f32.mrf.mxu0
  %v542 = vadd.f32 %v90, %v541
  %v543 = vpop.f32.mrf.mxu0
  %v544 = vadd.f32 %v94, %v543
  %v545 = vpop.f32.mrf.mxu0
  %v546 = vadd.f32 %v90, %v545
  %v547 = vpop.f32.mrf.mxu0
  %v548 = vadd.f32 %v94, %v547
  %549 = vmatprep.mubr.bf16.mxu0 %v214
  %550 = vmatmul.mubr.bf16.gmra.mxu0 %v213
  %v551 = vpop.f32.mrf.mxu0
  %v552 = vadd.f32 %v90, %v551
  %v553 = vpop.f32.mrf.mxu0
  %v554 = vadd.f32 %v94, %v553
  %v555 = vpop.f32.mrf.mxu0
  %v556 = vadd.f32 %v90, %v555
  %v557 = vpop.f32.mrf.mxu0
  %v558 = vadd.f32 %v94, %v557
  %559 = vmatprep.mubr.bf16.mxu0 %v216
  %560 = vmatmul.mubr.bf16.gmra.mxu0 %v215
  %v561 = vpop.f32.mrf.mxu0
  %v562 = vadd.f32 %v90, %v561
  %v563 = vpop.f32.mrf.mxu0
  %v564 = vadd.f32 %v94, %v563
  %v565 = vpop.f32.mrf.mxu0
  %v566 = vadd.f32 %v90, %v565
  %v567 = vpop.f32.mrf.mxu0
  %v568 = vadd.f32 %v94, %v567
  %569 = vmatprep.mubr.bf16.mxu0 %v218
  %570 = vmatmul.mubr.bf16.gmra.mxu0 %v217
  %v571 = vpop.f32.mrf.mxu0
  %v572 = vadd.f32 %v90, %v571
  %v573 = vpop.f32.mrf.mxu0
  %v574 = vadd.f32 %v94, %v573
  %v575 = vpop.f32.mrf.mxu0
  %v576 = vadd.f32 %v90, %v575
  %v577 = vpop.f32.mrf.mxu0
  %v578 = vadd.f32 %v94, %v577
  %579 = vmatprep.mubr.bf16.mxu0 %v220
  %580 = vmatmul.mubr.bf16.gmra.mxu0 %v219
  %v581 = vpop.f32.mrf.mxu0
  %v582 = vadd.f32 %v90, %v581
  %v583 = vpop.f32.mrf.mxu0
  %v584 = vadd.f32 %v94, %v583
  %v585 = vpop.f32.mrf.mxu0
  %v586 = vadd.f32 %v90, %v585
  %v587 = vpop.f32.mrf.mxu0
  %v588 = vadd.f32 %v94, %v587
  %589 = vmatprep.mubr.bf16.mxu0 %v222
  %590 = vmatmul.mubr.bf16.gmra.mxu0 %v221
  %v591 = vpop.f32.mrf.mxu0
  %v592 = vadd.f32 %v90, %v591
  %v593 = vpop.f32.mrf.mxu0
  %v594 = vadd.f32 %v94, %v593
  %v595 = vpop.f32.mrf.mxu0
  %v596 = vadd.f32 %v90, %v595
  %v597 = vpop.f32.mrf.mxu0
  %v598 = vadd.f32 %v94, %v597
  %599 = vmatprep.mubr.bf16.mxu0 %v224
  %600 = vmatmul.mubr.bf16.gmra.mxu0 %v223
  %v601 = vpop.f32.mrf.mxu0
  %v602 = vadd.f32 %v90, %v601
  %v603 = vpop.f32.mrf.mxu0
  %v604 = vadd.f32 %v94, %v603
  %v605 = vpop.f32.mrf.mxu0
  %v606 = vadd.f32 %v90, %v605
  %v607 = vpop.f32.mrf.mxu0
  %v608 = vadd.f32 %v94, %v607
  %609 = vdwg.mxu0
  %v610 = vmax.f32 %v452, 0.0
  %v611 = vmax.f32 %v454, 0.0
  %v612 = vmax.f32 %v456, 0.0
  %v613 = vmax.f32 %v458, 0.0
  %v614 = vmax.f32 %v462, 0.0
  %v615 = vmax.f32 %v464, 0.0
  %v616 = vmax.f32 %v466, 0.0
  %v617 = vmax.f32 %v468, 0.0
  %v618 = vmax.f32 %v472, 0.0
  %v619 = vmax.f32 %v474, 0.0
  %v620 = vmax.f32 %v476, 0.0
  %v621 = vmax.f32 %v478, 0.0
  %v622 = vmax.f32 %v482, 0.0
  %v623 = vmax.f32 %v484, 0.0
  %v624 = vmax.f32 %v486, 0.0
  %v625 = vmax.f32 %v488, 0.0
  %v626 = vmax.f32 %v492, 0.0
  %v627 = vmax.f32 %v494, 0.0
  %v628 = vmax.f32 %v496, 0.0
  %v629 = vmax.f32 %v498, 0.0
  %v630 = vmax.f32 %v502, 0.0
  %v631 = vmax.f32 %v504, 0.0
  %v632 = vmax.f32 %v506, 0.0
  %v633 = vmax.f32 %v508, 0.0
  %v634 = vmax.f32 %v512, 0.0
  %v635 = vmax.f32 %v514, 0.0
  %v636 = vmax.f32 %v516, 0.0
  %v637 = vmax.f32 %v518, 0.0
  %v638 = vmax.f32 %v522, 0.0
  %v639 = vmax.f32 %v524, 0.0
  %v640 = vmax.f32 %v526, 0.0
  %v641 = vmax.f32 %v528, 0.0
  %v642 = vmax.f32 %v532, 0.0
  %v643 = vmax.f32 %v534, 0.0
  %v644 = vmax.f32 %v536, 0.0
  %v645 = vmax.f32 %v538, 0.0
  %v646 = vmax.f32 %v542, 0.0
  %v647 = vmax.f32 %v544, 0.0
  %v648 = vmax.f32 %v546, 0.0
  %v649 = vmax.f32 %v548, 0.0
  %v650 = vmax.f32 %v552, 0.0
  %v651 = vmax.f32 %v554, 0.0
  %v652 = vmax.f32 %v556, 0.0
  %v653 = vmax.f32 %v558, 0.0
  %v654 = vmax.f32 %v562, 0.0
  %v655 = vmax.f32 %v564, 0.0
  %v656 = vmax.f32 %v566, 0.0
  %v657 = vmax.f32 %v568, 0.0
  %v658 = vmax.f32 %v572, 0.0
  %v659 = vmax.f32 %v574, 0.0
  %v660 = vmax.f32 %v576, 0.0
  %v661 = vmax.f32 %v578, 0.0
  %v662 = vmax.f32 %v582, 0.0
  %v663 = vmax.f32 %v584, 0.0
  %v664 = vmax.f32 %v586, 0.0
  %v665 = vmax.f32 %v588, 0.0
  %v666 = vmax.f32 %v592, 0.0
  %v667 = vmax.f32 %v594, 0.0
  %v668 = vmax.f32 %v596, 0.0
  %v669 = vmax.f32 %v598, 0.0
  %v670 = vmax.f32 %v602, 0.0
  %v671 = vmax.f32 %v604, 0.0
  %v672 = vmax.f32 %v606, 0.0
  %v673 = vmax.f32 %v608, 0.0
  %v674 = vpack.c.bf16 %v612, %v610
  %v675 = vpack.c.bf16 %v613, %v611
  %v676 = vpack.c.bf16 %v616, %v614
  %v677 = vpack.c.bf16 %v617, %v615
  %v678 = vpack.c.bf16 %v620, %v618
  %v679 = vpack.c.bf16 %v621, %v619
  %v680 = vpack.c.bf16 %v624, %v622
  %v681 = vpack.c.bf16 %v625, %v623
  %v682 = vpack.c.bf16 %v628, %v626
  %v683 = vpack.c.bf16 %v629, %v627
  %v684 = vpack.c.bf16 %v632, %v630
  %v685 = vpack.c.bf16 %v633, %v631
  %v686 = vpack.c.bf16 %v636, %v634
  %v687 = vpack.c.bf16 %v637, %v635
  %v688 = vpack.c.bf16 %v640, %v638
  %v689 = vpack.c.bf16 %v641, %v639
  %v690 = vpack.c.bf16 %v644, %v642
  %v691 = vpack.c.bf16 %v645, %v643
  %v692 = vpack.c.bf16 %v648, %v646
  %v693 = vpack.c.bf16 %v649, %v647
  %v694 = vpack.c.bf16 %v652, %v650
  %v695 = vpack.c.bf16 %v653, %v651
  %v696 = vpack.c.bf16 %v656, %v654
  %v697 = vpack.c.bf16 %v657, %v655
  %v698 = vpack.c.bf16 %v660, %v658
  %v699 = vpack.c.bf16 %v661, %v659
  %v700 = vpack.c.bf16 %v664, %v662
  %v701 = vpack.c.bf16 %v665, %v663
  %v702 = vpack.c.bf16 %v668, %v666
  %v703 = vpack.c.bf16 %v669, %v667
  %v704 = vpack.c.bf16 %v672, %v670
  %v705 = vpack.c.bf16 %v673, %v671
  %v706 = vld [vmem:[%s3] sm:$0xf]
  %v707 = vld [vmem:[%s3 + $0x4] sm:$0xf]
  %v708 = vld [vmem:[%s3 + $0x8] sm:$0xf]
  %v709 = vld [vmem:[%s3 + $0xc] sm:$0xf]
  %v710 = vld [vmem:[%s3 + $0x10] sm:$0xf]
  %v711 = vld [vmem:[%s3 + $0x14] sm:$0xf]
  %v712 = vld [vmem:[%s3 + $0x18] sm:$0xf]
  %v713 = vld [vmem:[%s3 + $0x1c] sm:$0xf]
  %v714 = vld [vmem:[%s3 + $0x20] sm:$0xf]
  %v715 = vld [vmem:[%s3 + $0x24] sm:$0xf]
  %v716 = vld [vmem:[%s3 + $0x28] sm:$0xf]
  %v717 = vld [vmem:[%s3 + $0x2c] sm:$0xf]
  %v718 = vld [vmem:[%s3 + $0x30] sm:$0xf]
  %v719 = vld [vmem:[%s3 + $0x34] sm:$0xf]
  %v720 = vld [vmem:[%s3 + $0x38] sm:$0xf]
  %v721 = vld [vmem:[%s3 + $0x3c] sm:$0xf]
  %v722 = vld [vmem:[%s3 + $0x40] sm:$0xf]
  %v723 = vld [vmem:[%s3 + $0x44] sm:$0xf]
  %v724 = vld [vmem:[%s3 + $0x48] sm:$0xf]
  %v725 = vld [vmem:[%s3 + $0x4c] sm:$0xf]
  %v726 = vld [vmem:[%s3 + $0x50] sm:$0xf]
  %v727 = vld [vmem:[%s3 + $0x54] sm:$0xf]
  %v728 = vld [vmem:[%s3 + $0x58] sm:$0xf]
  %v729 = vld [vmem:[%s3 + $0x5c] sm:$0xf]
  %v730 = vld [vmem:[%s3 + $0x60] sm:$0xf]
  %v731 = vld [vmem:[%s3 + $0x64] sm:$0xf]
  %v732 = vld [vmem:[%s3 + $0x68] sm:$0xf]
  %v733 = vld [vmem:[%s3 + $0x6c] sm:$0xf]
  %v734 = vld [vmem:[%s3 + $0x70] sm:$0xf]
  %v735 = vld [vmem:[%s3 + $0x74] sm:$0xf]
  %v736 = vld [vmem:[%s3 + $0x78] sm:$0xf]
  %v737 = vld [vmem:[%s3 + $0x7c] sm:$0xf]
  %v738 = vld [vmem:[%s4] sm:$0x1]
  %v740 = vlaneseq
  %v741 = vshrl.u32 %v740, 7
  %v742 = vsub.s32 0, %v741
  %v743 = vrot.slane %v738, %v742
  %v777 = vunpack.c.l.b16 %v706
  %v778 = vunpack.c.l.b16 %v707
  %v779 = vunpack.c.l.b16 %v708
  %v780 = vunpack.c.l.b16 %v709
  %v781 = vunpack.c.l.b16 %v710
  %v782 = vunpack.c.l.b16 %v711
  %v783 = vunpack.c.l.b16 %v712
  %v784 = vunpack.c.l.b16 %v713
  %v785 = vunpack.c.l.b16 %v714
  %v786 = vunpack.c.l.b16 %v715
  %v787 = vunpack.c.l.b16 %v716
  %v788 = vunpack.c.l.b16 %v717
  %v789 = vunpack.c.l.b16 %v718
  %v790 = vunpack.c.l.b16 %v719
  %v791 = vunpack.c.l.b16 %v720
  %v792 = vunpack.c.l.b16 %v721
  %v793 = vunpack.c.l.b16 %v722
  %v794 = vunpack.c.l.b16 %v723
  %v795 = vunpack.c.l.b16 %v724
  %v796 = vunpack.c.l.b16 %v725
  %v797 = vunpack.c.l.b16 %v726
  %v798 = vunpack.c.l.b16 %v727
  %v799 = vunpack.c.l.b16 %v728
  %v800 = vunpack.c.l.b16 %v729
  %v801 = vunpack.c.l.b16 %v730
  %v802 = vunpack.c.l.b16 %v731
  %v803 = vunpack.c.l.b16 %v732
  %v804 = vunpack.c.l.b16 %v733
  %v805 = vunpack.c.l.b16 %v734
  %v806 = vunpack.c.l.b16 %v735
  %v807 = vunpack.c.l.b16 %v736
  %v808 = vunpack.c.l.b16 %v737
  %v809 = vpack.c.b16 %v778, %v777
  %v810 = vpack.c.b16 %v780, %v779
  %v811 = vpack.c.b16 %v782, %v781
  %v812 = vpack.c.b16 %v784, %v783
  %v813 = vpack.c.b16 %v786, %v785
  %v814 = vpack.c.b16 %v788, %v787
  %v815 = vpack.c.b16 %v790, %v789
  %v816 = vpack.c.b16 %v792, %v791
  %v817 = vpack.c.b16 %v794, %v793
  %v818 = vpack.c.b16 %v796, %v795
  %v819 = vpack.c.b16 %v798, %v797
  %v820 = vpack.c.b16 %v800, %v799
  %v821 = vpack.c.b16 %v802, %v801
  %v822 = vpack.c.b16 %v804, %v803
  %v823 = vpack.c.b16 %v806, %v805
  %v824 = vpack.c.b16 %v808, %v807
  %841 = vmatprep.subr.bf16.mxu0 0
  %842 = vmatpush1.bf16.msra.mxu0 %v816
  %843 = vmatprep.subr.bf16.mxu0 0
  %844 = vmatpush1.bf16.msra.mxu0 %v815
  %845 = vmatprep.subr.bf16.mxu0 0
  %846 = vmatpush1.bf16.msra.mxu0 %v814
  %847 = vmatprep.subr.bf16.mxu0 0
  %848 = vmatpush1.bf16.msra.mxu0 %v813
  %849 = vmatprep.subr.bf16.mxu0 0
  %850 = vmatpush1.bf16.msra.mxu0 %v812
  %851 = vmatprep.subr.bf16.mxu0 0
  %852 = vmatpush1.bf16.msra.mxu0 %v811
  %853 = vmatprep.subr.bf16.mxu0 0
  %854 = vmatpush1.bf16.msra.mxu0 %v810
  %855 = vmatprep.subr.bf16.mxu0 0
  %856 = vmatpush1.bf16.msra.mxu0 %v809
  %857 = vmatprep.subr.bf16.mxu0 0
  %858 = vmatpush2.bf16.msra.mxu0 %v824
  %859 = vmatprep.subr.bf16.mxu0 0
  %860 = vmatpush2.bf16.msra.mxu0 %v823
  %861 = vmatprep.subr.bf16.mxu0 0
  %862 = vmatpush2.bf16.msra.mxu0 %v822
  %863 = vmatprep.subr.bf16.mxu0 0
  %864 = vmatpush2.bf16.msra.mxu0 %v821
  %865 = vmatprep.subr.bf16.mxu0 0
  %866 = vmatpush2.bf16.msra.mxu0 %v820
  %867 = vmatprep.subr.bf16.mxu0 0
  %868 = vmatpush2.bf16.msra.mxu0 %v819
  %869 = vmatprep.subr.bf16.mxu0 0
  %870 = vmatpush2.bf16.msra.mxu0 %v818
  %871 = vmatprep.subr.bf16.mxu0 0
  %872 = vmatpush2.bf16.msra.mxu0 %v817
  %873 = vmatprep.mubr.bf16.mxu0 %v675
  %874 = vmatmul.mubr.bf16.gmra.mxu0 %v674
  %v875 = vpop.f32.mrf.mxu0
  %v876 = vadd.f32 %v743, %v875
  %v877 = vpop.f32.mrf.mxu0
  %v878 = vpop.f32.mrf.mxu0
  %v879 = vadd.f32 %v743, %v878
  %v880 = vpop.f32.mrf.mxu0
  %881 = vmatprep.mubr.bf16.mxu0 %v677
  %882 = vmatmul.mubr.bf16.gmra.mxu0 %v676
  %v883 = vpop.f32.mrf.mxu0
  %v884 = vadd.f32 %v743, %v883
  %v885 = vpop.f32.mrf.mxu0
  %v886 = vpop.f32.mrf.mxu0
  %v887 = vadd.f32 %v743, %v886
  %v888 = vpop.f32.mrf.mxu0
  %889 = vmatprep.mubr.bf16.mxu0 %v679
  %890 = vmatmul.mubr.bf16.gmra.mxu0 %v678
  %v891 = vpop.f32.mrf.mxu0
  %v892 = vadd.f32 %v743, %v891
  %v893 = vpop.f32.mrf.mxu0
  %v894 = vpop.f32.mrf.mxu0
  %v895 = vadd.f32 %v743, %v894
  %v896 = vpop.f32.mrf.mxu0
  %897 = vmatprep.mubr.bf16.mxu0 %v681
  %898 = vmatmul.mubr.bf16.gmra.mxu0 %v680
  %v899 = vpop.f32.mrf.mxu0
  %v900 = vadd.f32 %v743, %v899
  %v901 = vpop.f32.mrf.mxu0
  %v902 = vpop.f32.mrf.mxu0
  %v903 = vadd.f32 %v743, %v902
  %v904 = vpop.f32.mrf.mxu0
  %905 = vmatprep.mubr.bf16.mxu0 %v683
  %906 = vmatmul.mubr.bf16.gmra.mxu0 %v682
  %v907 = vpop.f32.mrf.mxu0
  %v908 = vadd.f32 %v743, %v907
  %v909 = vpop.f32.mrf.mxu0
  %v910 = vpop.f32.mrf.mxu0
  %v911 = vadd.f32 %v743, %v910
  %v912 = vpop.f32.mrf.mxu0
  %913 = vmatprep.mubr.bf16.mxu0 %v685
  %914 = vmatmul.mubr.bf16.gmra.mxu0 %v684
  %v915 = vpop.f32.mrf.mxu0
  %v916 = vadd.f32 %v743, %v915
  %v917 = vpop.f32.mrf.mxu0
  %v918 = vpop.f32.mrf.mxu0
  %v919 = vadd.f32 %v743, %v918
  %v920 = vpop.f32.mrf.mxu0
  %921 = vmatprep.mubr.bf16.mxu0 %v687
  %922 = vmatmul.mubr.bf16.gmra.mxu0 %v686
  %v923 = vpop.f32.mrf.mxu0
  %v924 = vadd.f32 %v743, %v923
  %v925 = vpop.f32.mrf.mxu0
  %v926 = vpop.f32.mrf.mxu0
  %v927 = vadd.f32 %v743, %v926
  %v928 = vpop.f32.mrf.mxu0
  %929 = vmatprep.mubr.bf16.mxu0 %v689
  %930 = vmatmul.mubr.bf16.gmra.mxu0 %v688
  %v931 = vpop.f32.mrf.mxu0
  %v932 = vadd.f32 %v743, %v931
  %v933 = vpop.f32.mrf.mxu0
  %v934 = vpop.f32.mrf.mxu0
  %v935 = vadd.f32 %v743, %v934
  %v936 = vpop.f32.mrf.mxu0
  %937 = vmatprep.mubr.bf16.mxu0 %v691
  %938 = vmatmul.mubr.bf16.gmra.mxu0 %v690
  %v939 = vpop.f32.mrf.mxu0
  %v940 = vadd.f32 %v743, %v939
  %v941 = vpop.f32.mrf.mxu0
  %v942 = vpop.f32.mrf.mxu0
  %v943 = vadd.f32 %v743, %v942
  %v944 = vpop.f32.mrf.mxu0
  %945 = vmatprep.mubr.bf16.mxu0 %v693
  %946 = vmatmul.mubr.bf16.gmra.mxu0 %v692
  %v947 = vpop.f32.mrf.mxu0
  %v948 = vadd.f32 %v743, %v947
  %v949 = vpop.f32.mrf.mxu0
  %v950 = vpop.f32.mrf.mxu0
  %v951 = vadd.f32 %v743, %v950
  %v952 = vpop.f32.mrf.mxu0
  %953 = vmatprep.mubr.bf16.mxu0 %v695
  %954 = vmatmul.mubr.bf16.gmra.mxu0 %v694
  %v955 = vpop.f32.mrf.mxu0
  %v956 = vadd.f32 %v743, %v955
  %v957 = vpop.f32.mrf.mxu0
  %v958 = vpop.f32.mrf.mxu0
  %v959 = vadd.f32 %v743, %v958
  %v960 = vpop.f32.mrf.mxu0
  %961 = vmatprep.mubr.bf16.mxu0 %v697
  %962 = vmatmul.mubr.bf16.gmra.mxu0 %v696
  %v963 = vpop.f32.mrf.mxu0
  %v964 = vadd.f32 %v743, %v963
  %v965 = vpop.f32.mrf.mxu0
  %v966 = vpop.f32.mrf.mxu0
  %v967 = vadd.f32 %v743, %v966
  %v968 = vpop.f32.mrf.mxu0
  %969 = vmatprep.mubr.bf16.mxu0 %v699
  %970 = vmatmul.mubr.bf16.gmra.mxu0 %v698
  %v971 = vpop.f32.mrf.mxu0
  %v972 = vadd.f32 %v743, %v971
  %v973 = vpop.f32.mrf.mxu0
  %v974 = vpop.f32.mrf.mxu0
  %v975 = vadd.f32 %v743, %v974
  %v976 = vpop.f32.mrf.mxu0
  %977 = vmatprep.mubr.bf16.mxu0 %v701
  %978 = vmatmul.mubr.bf16.gmra.mxu0 %v700
  %v979 = vpop.f32.mrf.mxu0
  %v980 = vadd.f32 %v743, %v979
  %v981 = vpop.f32.mrf.mxu0
  %v982 = vpop.f32.mrf.mxu0
  %v983 = vadd.f32 %v743, %v982
  %v984 = vpop.f32.mrf.mxu0
  %985 = vmatprep.mubr.bf16.mxu0 %v703
  %986 = vmatmul.mubr.bf16.gmra.mxu0 %v702
  %v987 = vpop.f32.mrf.mxu0
  %v988 = vadd.f32 %v743, %v987
  %v989 = vpop.f32.mrf.mxu0
  %v990 = vpop.f32.mrf.mxu0
  %v991 = vadd.f32 %v743, %v990
  %v992 = vpop.f32.mrf.mxu0
  %993 = vmatprep.mubr.bf16.mxu0 %v705
  %994 = vmatmul.mubr.bf16.gmra.mxu0 %v704
  %v995 = vpop.f32.mrf.mxu0
  %v996 = vadd.f32 %v743, %v995
  %v997 = vpop.f32.mrf.mxu0
  %v998 = vpop.f32.mrf.mxu0
  %v999 = vadd.f32 %v743, %v998
  %v1000 = vpop.f32.mrf.mxu0
  %1001 = vdwg.mxu0
  %1002 = vmax.xlane.f32.xlu0 %v876
  %v1003 = vpop.xlane.xlu0 %1002
  %1004 = vmax.xlane.f32.xlu0 %v879
  %v1005 = vpop.xlane.xlu0 %1004
  %1006 = vmax.xlane.f32.xlu0 %v884
  %v1007 = vpop.xlane.xlu0 %1006
  %1008 = vmax.xlane.f32.xlu0 %v887
  %v1009 = vpop.xlane.xlu0 %1008
  %1010 = vmax.xlane.f32.xlu0 %v892
  %v1011 = vpop.xlane.xlu0 %1010
  %1012 = vmax.xlane.f32.xlu0 %v895
  %v1013 = vpop.xlane.xlu0 %1012
  %1014 = vmax.xlane.f32.xlu0 %v900
  %v1015 = vpop.xlane.xlu0 %1014
  %1016 = vmax.xlane.f32.xlu0 %v903
  %v1017 = vpop.xlane.xlu0 %1016
  %1018 = vmax.xlane.f32.xlu0 %v908
  %v1019 = vpop.xlane.xlu0 %1018
  %1020 = vmax.xlane.f32.xlu0 %v911
  %v1021 = vpop.xlane.xlu0 %1020
  %1022 = vmax.xlane.f32.xlu0 %v916
  %v1023 = vpop.xlane.xlu0 %1022
  %1024 = vmax.xlane.f32.xlu0 %v919
  %v1025 = vpop.xlane.xlu0 %1024
  %1026 = vmax.xlane.f32.xlu0 %v924
  %v1027 = vpop.xlane.xlu0 %1026
  %1028 = vmax.xlane.f32.xlu0 %v927
  %v1029 = vpop.xlane.xlu0 %1028
  %1030 = vmax.xlane.f32.xlu0 %v932
  %v1031 = vpop.xlane.xlu0 %1030
  %1032 = vmax.xlane.f32.xlu0 %v935
  %v1033 = vpop.xlane.xlu0 %1032
  %1034 = vmax.xlane.f32.xlu0 %v940
  %v1035 = vpop.xlane.xlu0 %1034
  %1036 = vmax.xlane.f32.xlu0 %v943
  %v1037 = vpop.xlane.xlu0 %1036
  %1038 = vmax.xlane.f32.xlu0 %v948
  %v1039 = vpop.xlane.xlu0 %1038
  %1040 = vmax.xlane.f32.xlu0 %v951
  %v1041 = vpop.xlane.xlu0 %1040
  %1042 = vmax.xlane.f32.xlu0 %v956
  %v1043 = vpop.xlane.xlu0 %1042
  %1044 = vmax.xlane.f32.xlu0 %v959
  %v1045 = vpop.xlane.xlu0 %1044
  %1046 = vmax.xlane.f32.xlu0 %v964
  %v1047 = vpop.xlane.xlu0 %1046
  %1048 = vmax.xlane.f32.xlu0 %v967
  %v1049 = vpop.xlane.xlu0 %1048
  %1050 = vmax.xlane.f32.xlu0 %v972
  %v1051 = vpop.xlane.xlu0 %1050
  %1052 = vmax.xlane.f32.xlu0 %v975
  %v1053 = vpop.xlane.xlu0 %1052
  %1054 = vmax.xlane.f32.xlu0 %v980
  %v1055 = vpop.xlane.xlu0 %1054
  %1056 = vmax.xlane.f32.xlu0 %v983
  %v1057 = vpop.xlane.xlu0 %1056
  %1058 = vmax.xlane.f32.xlu0 %v988
  %v1059 = vpop.xlane.xlu0 %1058
  %1060 = vmax.xlane.f32.xlu0 %v991
  %v1061 = vpop.xlane.xlu0 %1060
  %1062 = vmax.xlane.f32.xlu0 %v996
  %v1063 = vpop.xlane.xlu0 %1062
  %1064 = vmax.xlane.f32.xlu0 %v999
  %v1065 = vpop.xlane.xlu0 %1064
  %v1066 = vsub.f32 %v876, %v1003
  %v1067 = vsub.f32 %v879, %v1005
  %v1068 = vsub.f32 %v884, %v1007
  %v1069 = vsub.f32 %v887, %v1009
  %v1070 = vsub.f32 %v892, %v1011
  %v1071 = vsub.f32 %v895, %v1013
  %v1072 = vsub.f32 %v900, %v1015
  %v1073 = vsub.f32 %v903, %v1017
  %v1074 = vsub.f32 %v908, %v1019
  %v1075 = vsub.f32 %v911, %v1021
  %v1076 = vsub.f32 %v916, %v1023
  %v1077 = vsub.f32 %v919, %v1025
  %v1078 = vsub.f32 %v924, %v1027
  %v1079 = vsub.f32 %v927, %v1029
  %v1080 = vsub.f32 %v932, %v1031
  %v1081 = vsub.f32 %v935, %v1033
  %v1082 = vsub.f32 %v940, %v1035
  %v1083 = vsub.f32 %v943, %v1037
  %v1084 = vsub.f32 %v948, %v1039
  %v1085 = vsub.f32 %v951, %v1041
  %v1086 = vsub.f32 %v956, %v1043
  %v1087 = vsub.f32 %v959, %v1045
  %v1088 = vsub.f32 %v964, %v1047
  %v1089 = vsub.f32 %v967, %v1049
  %v1090 = vsub.f32 %v972, %v1051
  %v1091 = vsub.f32 %v975, %v1053
  %v1092 = vsub.f32 %v980, %v1055
  %v1093 = vsub.f32 %v983, %v1057
  %v1094 = vsub.f32 %v988, %v1059
  %v1095 = vsub.f32 %v991, %v1061
  %v1096 = vsub.f32 %v996, %v1063
  %v1097 = vsub.f32 %v999, %v1065
  %v1098 = vmul.f32 %v1066, 1.442695
  %v1099 = vpow.pop %v1098
  %v1100 = vmul.f32 %v1067, 1.442695
  %v1101 = vpow.pop %v1100
  %v1102 = vmul.f32 %v1068, 1.442695
  %v1103 = vpow.pop %v1102
  %v1104 = vmul.f32 %v1069, 1.442695
  %v1105 = vpow.pop %v1104
  %v1106 = vmul.f32 %v1070, 1.442695
  %v1107 = vpow.pop %v1106
  %v1108 = vmul.f32 %v1071, 1.442695
  %v1109 = vpow.pop %v1108
  %v1110 = vmul.f32 %v1072, 1.442695
  %v1111 = vpow.pop %v1110
  %v1112 = vmul.f32 %v1073, 1.442695
  %v1113 = vpow.pop %v1112
  %v1114 = vmul.f32 %v1074, 1.442695
  %v1115 = vpow.pop %v1114
  %v1116 = vmul.f32 %v1075, 1.442695
  %v1117 = vpow.pop %v1116
  %v1118 = vmul.f32 %v1076, 1.442695
  %v1119 = vpow.pop %v1118
  %v1120 = vmul.f32 %v1077, 1.442695
  %v1121 = vpow.pop %v1120
  %v1122 = vmul.f32 %v1078, 1.442695
  %v1123 = vpow.pop %v1122
  %v1124 = vmul.f32 %v1079, 1.442695
  %v1125 = vpow.pop %v1124
  %v1126 = vmul.f32 %v1080, 1.442695
  %v1127 = vpow.pop %v1126
  %v1128 = vmul.f32 %v1081, 1.442695
  %v1129 = vpow.pop %v1128
  %v1130 = vmul.f32 %v1082, 1.442695
  %v1131 = vpow.pop %v1130
  %v1132 = vmul.f32 %v1083, 1.442695
  %v1133 = vpow.pop %v1132
  %v1134 = vmul.f32 %v1084, 1.442695
  %v1135 = vpow.pop %v1134
  %v1136 = vmul.f32 %v1085, 1.442695
  %v1137 = vpow.pop %v1136
  %v1138 = vmul.f32 %v1086, 1.442695
  %v1139 = vpow.pop %v1138
  %v1140 = vmul.f32 %v1087, 1.442695
  %v1141 = vpow.pop %v1140
  %v1142 = vmul.f32 %v1088, 1.442695
  %v1143 = vpow.pop %v1142
  %v1144 = vmul.f32 %v1089, 1.442695
  %v1145 = vpow.pop %v1144
  %v1146 = vmul.f32 %v1090, 1.442695
  %v1147 = vpow.pop %v1146
  %v1148 = vmul.f32 %v1091, 1.442695
  %v1149 = vpow.pop %v1148
  %v1150 = vmul.f32 %v1092, 1.442695
  %v1151 = vpow.pop %v1150
  %v1152 = vmul.f32 %v1093, 1.442695
  %v1153 = vpow.pop %v1152
  %v1154 = vmul.f32 %v1094, 1.442695
  %v1155 = vpow.pop %v1154
  %v1156 = vmul.f32 %v1095, 1.442695
  %v1157 = vpow.pop %v1156
  %v1158 = vmul.f32 %v1096, 1.442695
  %v1159 = vpow.pop %v1158
  %v1160 = vmul.f32 %v1097, 1.442695
  %v1161 = vpow.pop %v1160
  %1162 = vadd.xlane.f32.xlu0 %v1099
  %v1163 = vpop.xlane.xlu0 %1162
  %1164 = vadd.xlane.f32.xlu0 %v1101
  %v1165 = vpop.xlane.xlu0 %1164
  %1166 = vadd.xlane.f32.xlu0 %v1103
  %v1167 = vpop.xlane.xlu0 %1166
  %1168 = vadd.xlane.f32.xlu0 %v1105
  %v1169 = vpop.xlane.xlu0 %1168
  %1170 = vadd.xlane.f32.xlu0 %v1107
  %v1171 = vpop.xlane.xlu0 %1170
  %1172 = vadd.xlane.f32.xlu0 %v1109
  %v1173 = vpop.xlane.xlu0 %1172
  %1174 = vadd.xlane.f32.xlu0 %v1111
  %v1175 = vpop.xlane.xlu0 %1174
  %1176 = vadd.xlane.f32.xlu0 %v1113
  %v1177 = vpop.xlane.xlu0 %1176
  %1178 = vadd.xlane.f32.xlu0 %v1115
  %v1179 = vpop.xlane.xlu0 %1178
  %1180 = vadd.xlane.f32.xlu0 %v1117
  %v1181 = vpop.xlane.xlu0 %1180
  %1182 = vadd.xlane.f32.xlu0 %v1119
  %v1183 = vpop.xlane.xlu0 %1182
  %1184 = vadd.xlane.f32.xlu0 %v1121
  %v1185 = vpop.xlane.xlu0 %1184
  %1186 = vadd.xlane.f32.xlu0 %v1123
  %v1187 = vpop.xlane.xlu0 %1186
  %1188 = vadd.xlane.f32.xlu0 %v1125
  %v1189 = vpop.xlane.xlu0 %1188
  %1190 = vadd.xlane.f32.xlu0 %v1127
  %v1191 = vpop.xlane.xlu0 %1190
  %1192 = vadd.xlane.f32.xlu0 %v1129
  %v1193 = vpop.xlane.xlu0 %1192
  %1194 = vadd.xlane.f32.xlu0 %v1131
  %v1195 = vpop.xlane.xlu0 %1194
  %1196 = vadd.xlane.f32.xlu0 %v1133
  %v1197 = vpop.xlane.xlu0 %1196
  %1198 = vadd.xlane.f32.xlu0 %v1135
  %v1199 = vpop.xlane.xlu0 %1198
  %1200 = vadd.xlane.f32.xlu0 %v1137
  %v1201 = vpop.xlane.xlu0 %1200
  %1202 = vadd.xlane.f32.xlu0 %v1139
  %v1203 = vpop.xlane.xlu0 %1202
  %1204 = vadd.xlane.f32.xlu0 %v1141
  %v1205 = vpop.xlane.xlu0 %1204
  %1206 = vadd.xlane.f32.xlu0 %v1143
  %v1207 = vpop.xlane.xlu0 %1206
  %1208 = vadd.xlane.f32.xlu0 %v1145
  %v1209 = vpop.xlane.xlu0 %1208
  %1210 = vadd.xlane.f32.xlu0 %v1147
  %v1211 = vpop.xlane.xlu0 %1210
  %1212 = vadd.xlane.f32.xlu0 %v1149
  %v1213 = vpop.xlane.xlu0 %1212
  %1214 = vadd.xlane.f32.xlu0 %v1151
  %v1215 = vpop.xlane.xlu0 %1214
  %1216 = vadd.xlane.f32.xlu0 %v1153
  %v1217 = vpop.xlane.xlu0 %1216
  %1218 = vadd.xlane.f32.xlu0 %v1155
  %v1219 = vpop.xlane.xlu0 %1218
  %1220 = vadd.xlane.f32.xlu0 %v1157
  %v1221 = vpop.xlane.xlu0 %1220
  %1222 = vadd.xlane.f32.xlu0 %v1159
  %v1223 = vpop.xlane.xlu0 %1222
  %1224 = vadd.xlane.f32.xlu0 %v1161
  %v1225 = vpop.xlane.xlu0 %1224
  %v1226 = vrcp.pop %v1163
  %v1227 = vrcp.pop %v1165
  %v1228 = vrcp.pop %v1167
  %v1229 = vrcp.pop %v1169
  %v1230 = vrcp.pop %v1171
  %v1231 = vrcp.pop %v1173
  %v1232 = vrcp.pop %v1175
  %v1233 = vrcp.pop %v1177
  %v1234 = vrcp.pop %v1179
  %v1235 = vrcp.pop %v1181
  %v1236 = vrcp.pop %v1183
  %v1237 = vrcp.pop %v1185
  %v1238 = vrcp.pop %v1187
  %v1239 = vrcp.pop %v1189
  %v1240 = vrcp.pop %v1191
  %v1241 = vrcp.pop %v1193
  %v1242 = vrcp.pop %v1195
  %v1243 = vrcp.pop %v1197
  %v1244 = vrcp.pop %v1199
  %v1245 = vrcp.pop %v1201
  %v1246 = vrcp.pop %v1203
  %v1247 = vrcp.pop %v1205
  %v1248 = vrcp.pop %v1207
  %v1249 = vrcp.pop %v1209
  %v1250 = vrcp.pop %v1211
  %v1251 = vrcp.pop %v1213
  %v1252 = vrcp.pop %v1215
  %v1253 = vrcp.pop %v1217
  %v1254 = vrcp.pop %v1219
  %v1255 = vrcp.pop %v1221
  %v1256 = vrcp.pop %v1223
  %v1257 = vrcp.pop %v1225
  %v1258 = vmul.f32 %v1163, %v1226
  %v1259 = vmul.f32 %v1165, %v1227
  %v1260 = vmul.f32 %v1167, %v1228
  %v1261 = vmul.f32 %v1169, %v1229
  %v1262 = vmul.f32 %v1171, %v1230
  %v1263 = vmul.f32 %v1173, %v1231
  %v1264 = vmul.f32 %v1175, %v1232
  %v1265 = vmul.f32 %v1177, %v1233
  %v1266 = vmul.f32 %v1179, %v1234
  %v1267 = vmul.f32 %v1181, %v1235
  %v1268 = vmul.f32 %v1183, %v1236
  %v1269 = vmul.f32 %v1185, %v1237
  %v1270 = vmul.f32 %v1187, %v1238
  %v1271 = vmul.f32 %v1189, %v1239
  %v1272 = vmul.f32 %v1191, %v1240
  %v1273 = vmul.f32 %v1193, %v1241
  %v1274 = vmul.f32 %v1195, %v1242
  %v1275 = vmul.f32 %v1197, %v1243
  %v1276 = vmul.f32 %v1199, %v1244
  %v1277 = vmul.f32 %v1201, %v1245
  %v1278 = vmul.f32 %v1203, %v1246
  %v1279 = vmul.f32 %v1205, %v1247
  %v1280 = vmul.f32 %v1207, %v1248
  %v1281 = vmul.f32 %v1209, %v1249
  %v1282 = vmul.f32 %v1211, %v1250
  %v1283 = vmul.f32 %v1213, %v1251
  %v1284 = vmul.f32 %v1215, %v1252
  %v1285 = vmul.f32 %v1217, %v1253
  %v1286 = vmul.f32 %v1219, %v1254
  %v1287 = vmul.f32 %v1221, %v1255
  %v1288 = vmul.f32 %v1223, %v1256
  %v1289 = vmul.f32 %v1225, %v1257
  %v1290 = vsub.f32 2.0, %v1258
  %v1291 = vsub.f32 2.0, %v1259
  %v1292 = vsub.f32 2.0, %v1260
  %v1293 = vsub.f32 2.0, %v1261
  %v1294 = vsub.f32 2.0, %v1262
  %v1295 = vsub.f32 2.0, %v1263
  %v1296 = vsub.f32 2.0, %v1264
  %v1297 = vsub.f32 2.0, %v1265
  %v1298 = vsub.f32 2.0, %v1266
  %v1299 = vsub.f32 2.0, %v1267
  %v1300 = vsub.f32 2.0, %v1268
  %v1301 = vsub.f32 2.0, %v1269
  %v1302 = vsub.f32 2.0, %v1270
  %v1303 = vsub.f32 2.0, %v1271
  %v1304 = vsub.f32 2.0, %v1272
  %v1305 = vsub.f32 2.0, %v1273
  %v1306 = vsub.f32 2.0, %v1274
  %v1307 = vsub.f32 2.0, %v1275
  %v1308 = vsub.f32 2.0, %v1276
  %v1309 = vsub.f32 2.0, %v1277
  %v1310 = vsub.f32 2.0, %v1278
  %v1311 = vsub.f32 2.0, %v1279
  %v1312 = vsub.f32 2.0, %v1280
  %v1313 = vsub.f32 2.0, %v1281
  %v1314 = vsub.f32 2.0, %v1282
  %v1315 = vsub.f32 2.0, %v1283
  %v1316 = vsub.f32 2.0, %v1284
  %v1317 = vsub.f32 2.0, %v1285
  %v1318 = vsub.f32 2.0, %v1286
  %v1319 = vsub.f32 2.0, %v1287
  %v1320 = vsub.f32 2.0, %v1288
  %v1321 = vsub.f32 2.0, %v1289
  %v1322 = vmul.f32 %v1226, %v1290
  %v1323 = vmul.f32 %v1227, %v1291
  %v1324 = vmul.f32 %v1228, %v1292
  %v1325 = vmul.f32 %v1229, %v1293
  %v1326 = vmul.f32 %v1230, %v1294
  %v1327 = vmul.f32 %v1231, %v1295
  %v1328 = vmul.f32 %v1232, %v1296
  %v1329 = vmul.f32 %v1233, %v1297
  %v1330 = vmul.f32 %v1234, %v1298
  %v1331 = vmul.f32 %v1235, %v1299
  %v1332 = vmul.f32 %v1236, %v1300
  %v1333 = vmul.f32 %v1237, %v1301
  %v1334 = vmul.f32 %v1238, %v1302
  %v1335 = vmul.f32 %v1239, %v1303
  %v1336 = vmul.f32 %v1240, %v1304
  %v1337 = vmul.f32 %v1241, %v1305
  %v1338 = vmul.f32 %v1242, %v1306
  %v1339 = vmul.f32 %v1243, %v1307
  %v1340 = vmul.f32 %v1244, %v1308
  %v1341 = vmul.f32 %v1245, %v1309
  %v1342 = vmul.f32 %v1246, %v1310
  %v1343 = vmul.f32 %v1247, %v1311
  %v1344 = vmul.f32 %v1248, %v1312
  %v1345 = vmul.f32 %v1249, %v1313
  %v1346 = vmul.f32 %v1250, %v1314
  %v1347 = vmul.f32 %v1251, %v1315
  %v1348 = vmul.f32 %v1252, %v1316
  %v1349 = vmul.f32 %v1253, %v1317
  %v1350 = vmul.f32 %v1254, %v1318
  %v1351 = vmul.f32 %v1255, %v1319
  %v1352 = vmul.f32 %v1256, %v1320
  %v1353 = vmul.f32 %v1257, %v1321
  %v1354 = vmul.f32 %v1099, %v1322
  %v1355 = vmul.f32 %v1101, %v1323
  %v1356 = vmul.f32 %v1103, %v1324
  %v1357 = vmul.f32 %v1105, %v1325
  %v1358 = vmul.f32 %v1107, %v1326
  %v1359 = vmul.f32 %v1109, %v1327
  %v1360 = vmul.f32 %v1111, %v1328
  %v1361 = vmul.f32 %v1113, %v1329
  %v1362 = vmul.f32 %v1115, %v1330
  %v1363 = vmul.f32 %v1117, %v1331
  %v1364 = vmul.f32 %v1119, %v1332
  %v1365 = vmul.f32 %v1121, %v1333
  %v1366 = vmul.f32 %v1123, %v1334
  %v1367 = vmul.f32 %v1125, %v1335
  %v1368 = vmul.f32 %v1127, %v1336
  %v1369 = vmul.f32 %v1129, %v1337
  %v1370 = vmul.f32 %v1131, %v1338
  %v1371 = vmul.f32 %v1133, %v1339
  %v1372 = vmul.f32 %v1135, %v1340
  %v1373 = vmul.f32 %v1137, %v1341
  %v1374 = vmul.f32 %v1139, %v1342
  %v1375 = vmul.f32 %v1141, %v1343
  %v1376 = vmul.f32 %v1143, %v1344
  %v1377 = vmul.f32 %v1145, %v1345
  %v1378 = vmul.f32 %v1147, %v1346
  %v1379 = vmul.f32 %v1149, %v1347
  %v1380 = vmul.f32 %v1151, %v1348
  %v1381 = vmul.f32 %v1153, %v1349
  %v1382 = vmul.f32 %v1155, %v1350
  %v1383 = vmul.f32 %v1157, %v1351
  %v1384 = vmul.f32 %v1159, %v1352
  %v1385 = vmul.f32 %v1161, %v1353
  %1386 = vst [vmem:[%s5] sm:$0xff] %v1354
  %1387 = vst [vmem:[%s5 + $0x8] sm:$0xff] %v1355
  %1388 = vst [vmem:[%s5 + $0x10] sm:$0xff] %v1356
  %1389 = vst [vmem:[%s5 + $0x18] sm:$0xff] %v1357
  %1390 = vst [vmem:[%s5 + $0x20] sm:$0xff] %v1358
  %1391 = vst [vmem:[%s5 + $0x28] sm:$0xff] %v1359
  %1392 = vst [vmem:[%s5 + $0x30] sm:$0xff] %v1360
  %1393 = vst [vmem:[%s5 + $0x38] sm:$0xff] %v1361
  %1394 = vst [vmem:[%s5 + $0x40] sm:$0xff] %v1362
  %1395 = vst [vmem:[%s5 + $0x48] sm:$0xff] %v1363
  %1396 = vst [vmem:[%s5 + $0x50] sm:$0xff] %v1364
  %1397 = vst [vmem:[%s5 + $0x58] sm:$0xff] %v1365
  %1398 = vst [vmem:[%s5 + $0x60] sm:$0xff] %v1366
  %1399 = vst [vmem:[%s5 + $0x68] sm:$0xff] %v1367
  %1400 = vst [vmem:[%s5 + $0x70] sm:$0xff] %v1368
  %1401 = vst [vmem:[%s5 + $0x78] sm:$0xff] %v1369
  %1402 = vst [vmem:[%s5 + $0x80] sm:$0xff] %v1370
  %1403 = vst [vmem:[%s5 + $0x88] sm:$0xff] %v1371
  %1404 = vst [vmem:[%s5 + $0x90] sm:$0xff] %v1372
  %1405 = vst [vmem:[%s5 + $0x98] sm:$0xff] %v1373
  %1406 = vst [vmem:[%s5 + $0xa0] sm:$0xff] %v1374
  %1407 = vst [vmem:[%s5 + $0xa8] sm:$0xff] %v1375
  %1408 = vst [vmem:[%s5 + $0xb0] sm:$0xff] %v1376
  %1409 = vst [vmem:[%s5 + $0xb8] sm:$0xff] %v1377
  %1410 = vst [vmem:[%s5 + $0xc0] sm:$0xff] %v1378
  %1411 = vst [vmem:[%s5 + $0xc8] sm:$0xff] %v1379
  %1412 = vst [vmem:[%s5 + $0xd0] sm:$0xff] %v1380
  %1413 = vst [vmem:[%s5 + $0xd8] sm:$0xff] %v1381
  %1414 = vst [vmem:[%s5 + $0xe0] sm:$0xff] %v1382
  %1415 = vst [vmem:[%s5 + $0xe8] sm:$0xff] %v1383
  %1416 = vst [vmem:[%s5 + $0xf0] sm:$0xff] %v1384
  %1417 = vst [vmem:[%s5 + $0xf8] sm:$0xff] %v1385
  // Predicated region
  $region22: #{taskout_forward.1} parent=0 // pred_check
    _
  $region23: #{taskout_forward.1} parent=0 // pred_check_branch
    %1419 = sbr.rel (0) target = $region25
  $region24: #{taskout_forward.1} parent=0 // pred_region
    _
  $region25: #{taskout_forward.1} parent=0 // pred_fallthru
    _
  // Predicated region
  $region26: #{taskout_forward.1} parent=0 // pred_check
    _
  $region27: #{taskout_forward.1} parent=0 // pred_check_branch
    %1421 = sbr.rel (0) target = $region29
  $region28: #{taskout_forward.1} parent=0 // pred_region
    _
  $region29: #{taskout_forward.1} parent=0 // pred_fallthru
    _

</llo_original>
